<compile_context>
chip_gen: v7x
topology: tpu7x:2x2x1
jax: 0.10.0
libtpu: 0.0.40
codegen_flags: <defaults>
</compile_context>

<pallas_src>
import math

import jax
import jax.numpy as jnp
from jax import lax
from jax.experimental import pallas as pl
from jax.experimental.pallas import tpu as pltpu

# ---------------- config (small, deterministic) ----------------
B, CIN, H, W = 2, 4, 16, 16
HIDDEN = 32                    # backbone output channels == DETR hidden dim
NPF = HIDDEN // 2              # num_pos_feats of PositionEmbeddingSine
KH = KW = 3
STRIDE = 2
HO, WO = H // STRIDE, W // STRIDE
M = B * HO * WO                # 128 -> lane-dense last dim
K = KH * KW * CIN              # 36  -> im2col contraction dim
TEMPERATURE = 10000.0
SCALE = 2.0 * math.pi
EPS = 1e-6


# ---------------- fused kernel: conv matmul + bias + ReLU, sine pos-embedding ----
def _joiner_fused_kernel(w_ref, p_ref, b_ref, nm_ref, cmb_ref, idt_ref, ph_ref,
                         feat_ref, pos_ref):
    # ---- conv as one MXU matmul: (HIDDEN, K)bf16 @ (K, M)bf16 -> (HIDDEN, M)f32
    acc = jnp.dot(w_ref[...], p_ref[...], preferred_element_type=jnp.float32)
    feat_ref[...] = jnp.maximum(acc + b_ref[...], 0.0)          # bias (HIDDEN,1) bcast

    # ---- sine position embedding, all batches at once (lane-dense (2*NPF, M))
    # One matmul gives [y_cumsum | y_total | x_cumsum | x_total], each (1, M).
    s = jnp.dot(nm_ref[...], cmb_ref[...], preferred_element_type=jnp.float32)
    y = s[:, 0 * M:1 * M]
    y_tot = s[:, 1 * M:2 * M]
    x = s[:, 2 * M:3 * M]
    x_tot = s[:, 3 * M:4 * M]

    y_n = y / (y_tot + EPS) * SCALE                              # (1, M)
    x_n = x / (x_tot + EPS) * SCALE

    idt = idt_ref[...]                                           # (NPF, 1)  1/dim_t
    ph = ph_ref[...]                                             # (NPF, 1)  0 or pi/2
    # cos(v) == sin(v + pi/2): single transcendental per element, no select.
    pos_ref[0:NPF, :] = jnp.sin(y_n * idt + ph)                  # (NPF, M)
    pos_ref[NPF:2 * NPF, :] = jnp.sin(x_n * idt + ph)            # (NPF, M)


# ---------------- Joiner.forward ----------------
@jax.jit
def joiner_forward(padded_images, mask, conv_w, conv_b):
    # ----- im2col (transposed, lane-dense (K, M) layout) -----
    xp = jnp.pad(padded_images, ((0, 0), (0, 0), (1, 1), (1, 1)))   # (B,CIN,H+2,W+2)
    cols = []
    for ky in range(KH):
        for kx in range(KW):
            cols.append(xp[:, :, ky:ky + STRIDE * (HO - 1) + 1:STRIDE,
                              kx:kx + STRIDE * (WO - 1) + 1:STRIDE])  # (B,CIN,HO,WO)
    pat = jnp.stack(cols, axis=0)                                    # (9,B,CIN,HO,WO)
    patT = jnp.transpose(pat, (0, 2, 1, 3, 4)).reshape(K, M)         # (K, M)
    wT = jnp.transpose(conv_w, (0, 2, 3, 1)).reshape(HIDDEN, K)      # (HIDDEN, K)

    patT_bf = patT.astype(jnp.bfloat16)        # bf16 MXU operands, f32 accumulation
    wT_bf = wT.astype(jnp.bfloat16)
    bias = conv_b.reshape(HIDDEN, 1).astype(jnp.float32)

    # ----- mask downsample (nearest) + hoisted pos-embedding constants -----
    mask_ds = mask[:, ::STRIDE, ::STRIDE]                            # (B, HO, WO) bool
    nm = (~mask_ds).astype(jnp.float32).reshape(1, M)                # not_mask, flat

    mm = jnp.arange(M)
    b_i = mm // (HO * WO)
    h_i = (mm // WO) % HO
    w_i = mm % WO
    same_b = b_i[:, None] == b_i[None, :]
    same_w = w_i[:, None] == w_i[None, :]
    same_h = h_i[:, None] == h_i[None, :]
    h_le = h_i[:, None] <= h_i[None, :]
    w_le = w_i[:, None] <= w_i[None, :]
    cy = same_b & same_w & h_le              # cumsum over H
    cy_tot = same_b & same_w                 # total over H (last row of cumsum)
    cx = same_b & same_h & w_le              # cumsum over W
    cx_tot = same_b & same_h                 # total over W
    cmb = jnp.concatenate([cy, cy_tot, cx, cx_tot], axis=1).astype(jnp.float32)  # (M,4M)

    c = jnp.arange(NPF, dtype=jnp.float32)
    dim_t = TEMPERATURE ** (2.0 * jnp.floor(c / 2.0) / NPF)
    inv_dim_t = (1.0 / dim_t).reshape(NPF, 1).astype(jnp.float32)
    phase = jnp.where(jnp.arange(NPF) % 2 == 0, 0.0, math.pi / 2.0)
    phase = phase.astype(jnp.float32).reshape(NPF, 1)

    feat2d, pos2d = pl.pallas_call(
        _joiner_fused_kernel,
        out_shape=(jax.ShapeDtypeStruct((HIDDEN, M), jnp.float32),
                   jax.ShapeDtypeStruct((2 * NPF, M), jnp.float32)),
        grid=(1,),
        in_specs=[pl.BlockSpec((HIDDEN, K), lambda i: (0, 0)),
                  pl.BlockSpec((K, M), lambda i: (0, 0)),
                  pl.BlockSpec((HIDDEN, 1), lambda i: (0, 0)),
                  pl.BlockSpec((1, M), lambda i: (0, 0)),
                  pl.BlockSpec((M, 4 * M), lambda i: (0, 0)),
                  pl.BlockSpec((NPF, 1), lambda i: (0, 0)),
                  pl.BlockSpec((NPF, 1), lambda i: (0, 0))],
        out_specs=[pl.BlockSpec((HIDDEN, M), lambda i: (0, 0)),
                   pl.BlockSpec((2 * NPF, M), lambda i: (0, 0))],
        compiler_params=pltpu.CompilerParams(dimension_semantics=("arbitrary",)),
    )(wT_bf, patT_bf, bias, nm, cmb, inv_dim_t, phase)

    # NCHW plumbing done outside the kernel (layout only, no compute)
    tensor = jnp.transpose(feat2d.reshape(HIDDEN, B, HO, WO), (1, 0, 2, 3))
    pos = jnp.transpose(pos2d.reshape(HIDDEN, B, HO, WO), (1, 0, 2, 3))
    return tensor, mask_ds, pos


# ---------------- pure-JAX reference for correctness ----------------
def reference(padded_images, mask, conv_w, conv_b):
    y = lax.conv_general_dilated(
        padded_images, conv_w, (STRIDE, STRIDE), ((1, 1), (1, 1)),
        dimension_numbers=("NCHW", "OIHW", "NCHW"),
        precision=lax.Precision.HIGHEST)
    y = jnp.maximum(y + conv_b.reshape(1, HIDDEN, 1, 1), 0.0)

    mask_ds = mask[:, ::STRIDE, ::STRIDE]
    nm = (~mask_ds).astype(jnp.float32)
    y_embed = jnp.cumsum(nm, axis=1)
    x_embed = jnp.cumsum(nm, axis=2)
    y_embed = y_embed / (y_embed[:, -1:, :] + EPS) * SCALE
    x_embed = x_embed / (x_embed[:, :, -1:] + EPS) * SCALE
    dim_t = jnp.arange(NPF, dtype=jnp.float32)
    dim_t = TEMPERATURE ** (2.0 * jnp.floor(dim_t / 2.0) / NPF)
    px = x_embed[:, :, :, None] / dim_t
    py = y_embed[:, :, :, None] / dim_t
    px = jnp.stack([jnp.sin(px[:, :, :, 0::2]), jnp.cos(px[:, :, :, 1::2])],
                   axis=4).reshape(B, HO, WO, NPF)
    py = jnp.stack([jnp.sin(py[:, :, :, 0::2]), jnp.cos(py[:, :, :, 1::2])],
                   axis=4).reshape(B, HO, WO, NPF)
    pos = jnp.transpose(jnp.concatenate([py, px], axis=3), (0, 3, 1, 2))
    return y, mask_ds, pos


if __name__ == "__main__":
    key = jax.random.PRNGKey(0)
    k1, k2, k3 = jax.random.split(key, 3)
    padded_images = jax.random.normal(k1, (B, CIN, H, W), dtype=jnp.float32)
    conv_w = jax.random.normal(k2, (HIDDEN, CIN, KH, KW), dtype=jnp.float32) * 0.1
    conv_b = jax.random.normal(k3, (HIDDEN,), dtype=jnp.float32) * 0.1

    # mask: True == padded; each batch element has a different valid region
    col = jnp.arange(W)[None, None, :]
    row = jnp.arange(H)[None, :, None]
    valid_w = jnp.array([W, 12])[:, None, None]
    valid_h = jnp.array([H, 10])[:, None, None]
    mask = (col >= valid_w) | (row >= valid_h)                   # (B, H, W) bool

    tensor, mask_ds, pos = joiner_forward(padded_images, mask, conv_w, conv_b)
    jax.block_until_ready((tensor, mask_ds, pos))

    ref_t, ref_m, ref_p = reference(padded_images, mask, conv_w, conv_b)
    assert tensor.shape == (B, HIDDEN, HO, WO)
    assert mask_ds.shape == (B, HO, WO)
    assert pos.shape == (B, HIDDEN, HO, WO)
    assert jnp.allclose(tensor, ref_t, atol=2e-2, rtol=2e-2), "conv mismatch"
    assert bool(jnp.array_equal(mask_ds, ref_m)), "mask mismatch"
    assert jnp.allclose(pos, ref_p, atol=1e-4, rtol=1e-4), "pos mismatch"
    print("KERNEL_OK")
</pallas_src>

<mosaic_0001>
module attributes {stable_mosaic.version = 11 : i64} {
  func.func @_joiner_fused_kernel(%arg0: i32, %arg1: memref<32x36xbf16, #tpu.memory_space<vmem>>, %arg2: memref<36x128xbf16, #tpu.memory_space<vmem>>, %arg3: memref<32x1xf32, #tpu.memory_space<vmem>>, %arg4: memref<1x128xf32, #tpu.memory_space<vmem>>, %arg5: memref<128x512xf32, #tpu.memory_space<vmem>>, %arg6: memref<16x1xf32, #tpu.memory_space<vmem>>, %arg7: memref<16x1xf32, #tpu.memory_space<vmem>>, %arg8: memref<32x128xf32, #tpu.memory_space<vmem>>, %arg9: memref<32x128xf32, #tpu.memory_space<vmem>>) attributes {dimension_semantics = [#tpu.dimension_semantics<arbitrary>], iteration_bounds = array<i64: 1>, scalar_prefetch = 0 : i64, scratch_operands = 0 : i64, tpu.core_type = #tpu.core_type<tc>, window_params = [{pipeline_mode = #tpu.pipeline_mode<synchronous>, transform_indices = @transform_0, window_bounds = array<i64: 32, 36>}, {pipeline_mode = #tpu.pipeline_mode<synchronous>, transform_indices = @transform_1, window_bounds = array<i64: 36, 128>}, {pipeline_mode = #tpu.pipeline_mode<synchronous>, transform_indices = @transform_2, window_bounds = array<i64: 32, 1>}, {pipeline_mode = #tpu.pipeline_mode<synchronous>, transform_indices = @transform_3, window_bounds = array<i64: 1, 128>}, {pipeline_mode = #tpu.pipeline_mode<synchronous>, transform_indices = @transform_4, window_bounds = array<i64: 128, 512>}, {pipeline_mode = #tpu.pipeline_mode<synchronous>, transform_indices = @transform_5, window_bounds = array<i64: 16, 1>}, {pipeline_mode = #tpu.pipeline_mode<synchronous>, transform_indices = @transform_6, window_bounds = array<i64: 16, 1>}, {pipeline_mode = #tpu.pipeline_mode<synchronous>, transform_indices = @transform_7, window_bounds = array<i64: 32, 128>}, {pipeline_mode = #tpu.pipeline_mode<synchronous>, transform_indices = @transform_8, window_bounds = array<i64: 32, 128>}]} {
    %c0 = arith.constant 0 : index
    %c0_0 = arith.constant 0 : index
    %0 = vector.load %arg1[%c0, %c0_0] : memref<32x36xbf16, #tpu.memory_space<vmem>>, vector<32x36xbf16>
    %c0_1 = arith.constant 0 : index
    %c0_2 = arith.constant 0 : index
    %1 = vector.load %arg2[%c0_1, %c0_2] : memref<36x128xbf16, #tpu.memory_space<vmem>>, vector<36x128xbf16>
    %cst = arith.constant dense<0.000000e+00> : vector<32x128xf32>
    %2 = tpu.matmul %0, %1, %cst {dimension_numbers = #tpu.dot_dimension_numbers<[1], [0], [0], [1], [0, 0, 1, 1], [], []>} : vector<32x36xbf16>, vector<36x128xbf16>, vector<32x128xf32> -> vector<32x128xf32>
    %c0_3 = arith.constant 0 : index
    %c0_4 = arith.constant 0 : index
    %3 = vector.load %arg3[%c0_3, %c0_4] : memref<32x1xf32, #tpu.memory_space<vmem>>, vector<32x1xf32>
    %4 = vector.broadcast %3 : vector<32x1xf32> to vector<32x128xf32>
    %5 = arith.addf %2, %4 : vector<32x128xf32>
    %cst_5 = arith.constant 0.000000e+00 : f32
    %6 = vector.broadcast %cst_5 : f32 to vector<32x128xf32>
    %7 = arith.maximumf %5, %6 : vector<32x128xf32>
    %c0_6 = arith.constant 0 : index
    %c0_7 = arith.constant 0 : index
    %8 = vector.load %arg8[%c0_6, %c0_7] : memref<32x128xf32, #tpu.memory_space<vmem>>, vector<32x128xf32>
    tpu.vector_store %arg8[%c0_6, %c0_7], %7 {strides = array<i32>} : memref<32x128xf32, #tpu.memory_space<vmem>>, vector<32x128xf32>,
    %c0_8 = arith.constant 0 : index
    %c0_9 = arith.constant 0 : index
    %9 = vector.load %arg4[%c0_8, %c0_9] : memref<1x128xf32, #tpu.memory_space<vmem>>, vector<1x128xf32>
    %c0_10 = arith.constant 0 : index
    %c0_11 = arith.constant 0 : index
    %10 = vector.load %arg5[%c0_10, %c0_11] : memref<128x512xf32, #tpu.memory_space<vmem>>, vector<128x512xf32>
    %cst_12 = arith.constant dense<0.000000e+00> : vector<1x512xf32>
    %11 = tpu.matmul %9, %10, %cst_12 {dimension_numbers = #tpu.dot_dimension_numbers<[1], [0], [0], [1], [0, 0, 1, 1], [], []>} : vector<1x128xf32>, vector<128x512xf32>, vector<1x512xf32> -> vector<1x512xf32>
    %12 = vector.extract_strided_slice %11 {offsets = [0, 0], sizes = [1, 128], strides = [1, 1]} : vector<1x512xf32> to vector<1x128xf32>
    %13 = vector.extract_strided_slice %11 {offsets = [0, 128], sizes = [1, 128], strides = [1, 1]} : vector<1x512xf32> to vector<1x128xf32>
    %14 = vector.extract_strided_slice %11 {offsets = [0, 256], sizes = [1, 128], strides = [1, 1]} : vector<1x512xf32> to vector<1x128xf32>
    %15 = vector.extract_strided_slice %11 {offsets = [0, 384], sizes = [1, 128], strides = [1, 1]} : vector<1x512xf32> to vector<1x128xf32>
    %cst_13 = arith.constant 9.99999997E-7 : f32
    %16 = vector.broadcast %cst_13 : f32 to vector<1x128xf32>
    %17 = arith.addf %13, %16 : vector<1x128xf32>
    %18 = arith.divf %12, %17 : vector<1x128xf32>
    %cst_14 = arith.constant 6.28318548 : f32
    %19 = vector.broadcast %cst_14 : f32 to vector<1x128xf32>
    %20 = arith.mulf %18, %19 : vector<1x128xf32>
    %cst_15 = arith.constant 9.99999997E-7 : f32
    %21 = vector.broadcast %cst_15 : f32 to vector<1x128xf32>
    %22 = arith.addf %15, %21 : vector<1x128xf32>
    %23 = arith.divf %14, %22 : vector<1x128xf32>
    %cst_16 = arith.constant 6.28318548 : f32
    %24 = vector.broadcast %cst_16 : f32 to vector<1x128xf32>
    %25 = arith.mulf %23, %24 : vector<1x128xf32>
    %c0_17 = arith.constant 0 : index
    %c0_18 = arith.constant 0 : index
    %26 = vector.load %arg6[%c0_17, %c0_18] : memref<16x1xf32, #tpu.memory_space<vmem>>, vector<16x1xf32>
    %c0_19 = arith.constant 0 : index
    %c0_20 = arith.constant 0 : index
    %27 = vector.load %arg7[%c0_19, %c0_20] : memref<16x1xf32, #tpu.memory_space<vmem>>, vector<16x1xf32>
    %28 = vector.broadcast %20 : vector<1x128xf32> to vector<16x128xf32>
    %29 = vector.broadcast %26 : vector<16x1xf32> to vector<16x128xf32>
    %30 = arith.mulf %28, %29 : vector<16x128xf32>
    %31 = vector.broadcast %27 : vector<16x1xf32> to vector<16x128xf32>
    %32 = arith.addf %30, %31 : vector<16x128xf32>
    %33 = math.sin %32 : vector<16x128xf32>
    %c0_21 = arith.constant 0 : index
    %c0_22 = arith.constant 0 : index
    %34 = vector.load %arg9[%c0_21, %c0_22] : memref<32x128xf32, #tpu.memory_space<vmem>>, vector<16x128xf32>
    tpu.vector_store %arg9[%c0_21, %c0_22], %33 {strides = array<i32>} : memref<32x128xf32, #tpu.memory_space<vmem>>, vector<16x128xf32>,
    %35 = vector.broadcast %25 : vector<1x128xf32> to vector<16x128xf32>
    %36 = vector.broadcast %26 : vector<16x1xf32> to vector<16x128xf32>
    %37 = arith.mulf %35, %36 : vector<16x128xf32>
    %38 = vector.broadcast %27 : vector<16x1xf32> to vector<16x128xf32>
    %39 = arith.addf %37, %38 : vector<16x128xf32>
    %40 = math.sin %39 : vector<16x128xf32>
    %c16 = arith.constant 16 : index
    %c0_23 = arith.constant 0 : index
    %41 = vector.load %arg9[%c16, %c0_23] : memref<32x128xf32, #tpu.memory_space<vmem>>, vector<16x128xf32>
    tpu.vector_store %arg9[%c16, %c0_23], %40 {strides = array<i32>} : memref<32x128xf32, #tpu.memory_space<vmem>>, vector<16x128xf32>,
    return
  }
  func.func @transform_0(%arg0: i32) -> (i32, i32) {
    %c0_i32 = arith.constant 0 : i32
    %c0_i32_0 = arith.constant 0 : i32
    %c0_i32_1 = arith.constant 0 : i32
    return %c0_i32, %c0_i32_0 : i32, i32
  }
  func.func @transform_1(%arg0: i32) -> (i32, i32) {
    %c0_i32 = arith.constant 0 : i32
    %c0_i32_0 = arith.constant 0 : i32
    %c0_i32_1 = arith.constant 0 : i32
    return %c0_i32, %c0_i32_0 : i32, i32
  }
  func.func @transform_2(%arg0: i32) -> (i32, i32) {
    %c0_i32 = arith.constant 0 : i32
    %c0_i32_0 = arith.constant 0 : i32
    %c0_i32_1 = arith.constant 0 : i32
    return %c0_i32, %c0_i32_0 : i32, i32
  }
  func.func @transform_3(%arg0: i32) -> (i32, i32) {
    %c0_i32 = arith.constant 0 : i32
    %c0_i32_0 = arith.constant 0 : i32
    %c0_i32_1 = arith.constant 0 : i32
    return %c0_i32, %c0_i32_0 : i32, i32
  }
  func.func @transform_4(%arg0: i32) -> (i32, i32) {
    %c0_i32 = arith.constant 0 : i32
    %c0_i32_0 = arith.constant 0 : i32
    %c0_i32_1 = arith.constant 0 : i32
    return %c0_i32, %c0_i32_0 : i32, i32
  }
  func.func @transform_5(%arg0: i32) -> (i32, i32) {
    %c0_i32 = arith.constant 0 : i32
    %c0_i32_0 = arith.constant 0 : i32
    %c0_i32_1 = arith.constant 0 : i32
    return %c0_i32, %c0_i32_0 : i32, i32
  }
  func.func @transform_6(%arg0: i32) -> (i32, i32) {
    %c0_i32 = arith.constant 0 : i32
    %c0_i32_0 = arith.constant 0 : i32
    %c0_i32_1 = arith.constant 0 : i32
    return %c0_i32, %c0_i32_0 : i32, i32
  }
  func.func @transform_7(%arg0: i32) -> (i32, i32) {
    %c0_i32 = arith.constant 0 : i32
    %c0_i32_0 = arith.constant 0 : i32
    %c0_i32_1 = arith.constant 0 : i32
    return %c0_i32, %c0_i32_0 : i32, i32
  }
  func.func @transform_8(%arg0: i32) -> (i32, i32) {
    %c0_i32 = arith.constant 0 : i32
    %c0_i32_0 = arith.constant 0 : i32
    %c0_i32_1 = arith.constant 0 : i32
    return %c0_i32, %c0_i32_0 : i32, i32
  }
}

</mosaic_0001>

<llo_original>
// kernel: joiner_forward.1
$region0: #{joiner_forward.1}
  #allocation0 [shape = 'u32[]', space=smem, size = 0x4, offset = 0x4, fixed_abs, tag = 'smem constant byte address 0x4 - core index']
  #allocation1 [shape = 'u32[144,128]{1,0:T(1,128)}', space=vmem, size = 0x12000, scoped, tag = 'internal scratch']
  %s0 = inlined_call_operand.vmem [shape: bf16[32,36], index: 0, kind: input, shape index: {}]
  %s1 = inlined_call_operand.vmem [shape: bf16[36,128], index: 1, kind: input, shape index: {}]
  %s2 = inlined_call_operand.vmem [shape: f32[32,1], index: 2, kind: input, shape index: {}]
  %s3 = inlined_call_operand.vmem [shape: f32[1,128], index: 3, kind: input, shape index: {}]
  %s4 = inlined_call_operand.vmem [shape: f32[128,512], index: 4, kind: input, shape index: {}]
  %s5 = inlined_call_operand.vmem [shape: f32[16,1], index: 5, kind: input, shape index: {}]
  %s6 = inlined_call_operand.vmem [shape: f32[16,1], index: 6, kind: input, shape index: {}]
  %s7 = inlined_call_operand.vmem [shape: f32[32,128], index: 7, kind: output, shape index: {0}]
  %s8 = inlined_call_operand.vmem [shape: f32[32,128], index: 8, kind: output, shape index: {1}]
  %9 = xla_tuple %s7, %s8
  %s10 = sld [smem:[#allocation0]]
  $region46: #{joiner_forward.1} parent=0
    _
  %s12 = ssub.s32 1, %s10
  %s13 = scalar_select 0, %s12, %s10
  // Predicated region
  $region2: #{joiner_forward.1} parent=0 // pred_check
    _
  $region3: #{joiner_forward.1} parent=0 // pred_check_branch
    %15 = sbr.rel (0) target = $region5
  $region4: #{joiner_forward.1} parent=0 // pred_region
    _
  $region5: #{joiner_forward.1} parent=0 // pred_fallthru
    _
  // Predicated region
  $region6: #{joiner_forward.1} parent=0 // pred_check
    _
  $region7: #{joiner_forward.1} parent=0 // pred_check_branch
    %17 = sbr.rel (0) target = $region9
  $region8: #{joiner_forward.1} parent=0 // pred_region
    _
  $region9: #{joiner_forward.1} parent=0 // pred_fallthru
    _
  // Predicated region
  $region10: #{joiner_forward.1} parent=0 // pred_check
    _
  $region11: #{joiner_forward.1} parent=0 // pred_check_branch
    %19 = sbr.rel (0) target = $region13
  $region12: #{joiner_forward.1} parent=0 // pred_region
    _
  $region13: #{joiner_forward.1} parent=0 // pred_fallthru
    _
  // Predicated region
  $region14: #{joiner_forward.1} parent=0 // pred_check
    _
  $region15: #{joiner_forward.1} parent=0 // pred_check_branch
    %21 = sbr.rel (0) target = $region17
  $region16: #{joiner_forward.1} parent=0 // pred_region
    _
  $region17: #{joiner_forward.1} parent=0 // pred_fallthru
    _
  // Predicated region
  $region18: #{joiner_forward.1} parent=0 // pred_check
    _
  $region19: #{joiner_forward.1} parent=0 // pred_check_branch
    %23 = sbr.rel (0) target = $region21
  $region20: #{joiner_forward.1} parent=0 // pred_region
    _
  $region21: #{joiner_forward.1} parent=0 // pred_fallthru
    _
  // Predicated region
  $region22: #{joiner_forward.1} parent=0 // pred_check
    _
  $region23: #{joiner_forward.1} parent=0 // pred_check_branch
    %25 = sbr.rel (0) target = $region25
  $region24: #{joiner_forward.1} parent=0 // pred_region
    _
  $region25: #{joiner_forward.1} parent=0 // pred_fallthru
    _
  // Predicated region
  $region26: #{joiner_forward.1} parent=0 // pred_check
    _
  $region27: #{joiner_forward.1} parent=0 // pred_check_branch
    %27 = sbr.rel (0) target = $region29
  $region28: #{joiner_forward.1} parent=0 // pred_region
    _
  $region29: #{joiner_forward.1} parent=0 // pred_fallthru
    _
  %v29 = vld [vmem:[%s0] sm:$0xf]
  %v30 = vld [vmem:[%s0 + $0x4] sm:$0xf]
  %v31 = vld [vmem:[%s0 + $0x8] sm:$0xf]
  %v32 = vld [vmem:[%s0 + $0xc] sm:$0xf]
  %v33 = vld [vmem:[%s1] sm:$0xf]
  %v34 = vld [vmem:[%s1 + $0x4] sm:$0xf]
  %v35 = vld [vmem:[%s1 + $0x8] sm:$0xf]
  %v36 = vld [vmem:[%s1 + $0xc] sm:$0xf]
  %v37 = vld [vmem:[%s1 + $0x10] sm:$0x3]
  %v38 = vld [vmem:[%s2] sm:$0xff]
  %v39 = vld [vmem:[%s2 + $0x8] sm:$0xff]
  %v40 = vld [vmem:[%s2 + $0x10] sm:$0xff]
  %v41 = vld [vmem:[%s2 + $0x18] sm:$0xff]
  %43 = vset.pattern.permute.xlu0 0
  %44 = vperm.xlu0 %43, %v38
  %v45 = vpop.permute.xlu0 %44
  %48 = vset.pattern.permute.xlu0 0
  %49 = vperm.xlu0 %48, %v39
  %v50 = vpop.permute.xlu0 %49
  %53 = vset.pattern.permute.xlu0 0
  %54 = vperm.xlu0 %53, %v40
  %v55 = vpop.permute.xlu0 %54
  %58 = vset.pattern.permute.xlu0 0
  %59 = vperm.xlu0 %58, %v41
  %v60 = vpop.permute.xlu0 %59
  %v66 = vunpack.c.l.b16 %v29
  %v67 = vunpack.c.l.b16 %v30
  %v68 = vunpack.c.l.b16 %v31
  %v69 = vunpack.c.l.b16 %v32
  %v70 = vpack.c.b16 %v67, %v66
  %v71 = vpack.c.b16 %v69, %v68
  %v77 = vunpack.c.l.b16 %v33
  %v78 = vunpack.c.l.b16 %v34
  %v79 = vunpack.c.l.b16 %v35
  %v80 = vunpack.c.l.b16 %v36
  %v81 = vunpack.c.l.b16 %v37
  %v82 = vpack.c.b16 %v78, %v77
  %v83 = vpack.c.b16 %v80, %v79
  %v84 = vpack.c.b16 %v81, %v81
  %vm87 = vcmask 293888
  %v89 = vsel %vm87, %v70, 0
  %v92 = vsel %vm87, %v71, 0
  %vm94 = vcmask 1041408
  %v96 = vsel %vm94, %v84, 0
  %98 = vmatprep.subr.bf16.mxu0 0
  %99 = vmatpush1.bf16.msra.mxu0 %v82
  %100 = vmatprep.subr.bf16.mxu0 0
  %101 = vmatpush1.bf16.msra.mxu0 %v83
  %102 = vmatprep.subr.bf16.mxu0 0
  %103 = vmatpush1.bf16.msra.mxu0 %v96
  %104 = vmatprep.subr.bf16.mxu0 0
  %105 = vmatpush1.bf16.msra.mxu0 0
  %106 = vmatprep.subr.bf16.mxu0 0
  %107 = vmatpush1.bf16.msra.mxu0 0
  %108 = vmatprep.subr.bf16.mxu0 0
  %109 = vmatpush1.bf16.msra.mxu0 0
  %110 = vmatprep.subr.bf16.mxu0 0
  %111 = vmatpush1.bf16.msra.mxu0 0
  %112 = vmatprep.subr.bf16.mxu0 0
  %113 = vmatpush1.bf16.msra.mxu0 0
  %114 = vmatprep.subr.bf16.mxu0 0
  %115 = vmatpush1.bf16.msra.mxu0 0
  %116 = vmatprep.subr.bf16.mxu0 0
  %117 = vmatpush1.bf16.msra.mxu0 0
  %118 = vmatprep.subr.bf16.mxu0 0
  %119 = vmatpush1.bf16.msra.mxu0 0
  %120 = vmatprep.subr.bf16.mxu0 0
  %121 = vmatpush1.bf16.msra.mxu0 0
  %122 = vmatprep.subr.bf16.mxu0 0
  %123 = vmatpush1.bf16.msra.mxu0 0
  %124 = vmatprep.subr.bf16.mxu0 0
  %125 = vmatpush1.bf16.msra.mxu0 0
  %126 = vmatprep.subr.bf16.mxu0 0
  %127 = vmatpush1.bf16.msra.mxu0 0
  %128 = vmatprep.subr.bf16.mxu0 0
  %129 = vmatpush1.bf16.msra.mxu0 0
  %130 = vmatprep.mubr.bf16.mxu0 0
  %131 = vmatmul.mubr.bf16.gmra.mrb[0].mxu0 %v89
  %v132 = vpop.f32.mrb[0].mxu0
  %v133 = vadd.f32 %v45, %v132
  %v134 = vpop.f32.mrb[0].mxu0
  %v135 = vpop.f32.mrb[0].mxu0
  %v136 = vadd.f32 %v50, %v135
  %v137 = vpop.f32.mrb[0].mxu0
  %138 = vmatprep.mubr.bf16.mxu0 0
  %139 = vmatmul.mubr.bf16.gmra.mrb[0].mxu0 %v92
  %v140 = vpop.f32.mrb[0].mxu0
  %v141 = vadd.f32 %v55, %v140
  %v142 = vpop.f32.mrb[0].mxu0
  %v143 = vpop.f32.mrb[0].mxu0
  %v144 = vadd.f32 %v60, %v143
  %v145 = vpop.f32.mrb[0].mxu0
  %146 = vdwg.mxu0
  %v147 = vmax.f32 %v133, 0.0
  %v148 = vmax.f32 %v136, 0.0
  %v149 = vmax.f32 %v141, 0.0
  %v150 = vmax.f32 %v144, 0.0
  %151 = vst [vmem:[%s7] sm:$0xff] %v147
  %152 = vst [vmem:[%s7 + $0x8] sm:$0xff] %v148
  %153 = vst [vmem:[%s7 + $0x10] sm:$0xff] %v149
  %154 = vst [vmem:[%s7 + $0x18] sm:$0xff] %v150
  %v155 = vld [vmem:[%s3] sm:$0x1]
  %v156 = vld [vmem:[%s4] sm:$0xff]
  %v157 = vld [vmem:[%s4 + $0x8] sm:$0xff]
  %v158 = vld [vmem:[%s4 + $0x10] sm:$0xff]
  %v159 = vld [vmem:[%s4 + $0x18] sm:$0xff]
  %v160 = vld [vmem:[%s4 + $0x20] sm:$0xff]
  %v161 = vld [vmem:[%s4 + $0x28] sm:$0xff]
  %v162 = vld [vmem:[%s4 + $0x30] sm:$0xff]
  %v163 = vld [vmem:[%s4 + $0x38] sm:$0xff]
  %v164 = vld [vmem:[%s4 + $0x40] sm:$0xff]
  %v165 = vld [vmem:[%s4 + $0x48] sm:$0xff]
  %v166 = vld [vmem:[%s4 + $0x50] sm:$0xff]
  %v167 = vld [vmem:[%s4 + $0x58] sm:$0xff]
  %v168 = vld [vmem:[%s4 + $0x60] sm:$0xff]
  %v169 = vld [vmem:[%s4 + $0x68] sm:$0xff]
  %v170 = vld [vmem:[%s4 + $0x70] sm:$0xff]
  %v171 = vld [vmem:[%s4 + $0x78] sm:$0xff]
  %v172 = vld [vmem:[%s4 + $0x80] sm:$0xff]
  %v173 = vld [vmem:[%s4 + $0x88] sm:$0xff]
  %v174 = vld [vmem:[%s4 + $0x90] sm:$0xff]
  %v175 = vld [vmem:[%s4 + $0x98] sm:$0xff]
  %v176 = vld [vmem:[%s4 + $0xa0] sm:$0xff]
  %v177 = vld [vmem:[%s4 + $0xa8] sm:$0xff]
  %v178 = vld [vmem:[%s4 + $0xb0] sm:$0xff]
  %v179 = vld [vmem:[%s4 + $0xb8] sm:$0xff]
  %v180 = vld [vmem:[%s4 + $0xc0] sm:$0xff]
  %v181 = vld [vmem:[%s4 + $0xc8] sm:$0xff]
  %v182 = vld [vmem:[%s4 + $0xd0] sm:$0xff]
  %v183 = vld [vmem:[%s4 + $0xd8] sm:$0xff]
  %v184 = vld [vmem:[%s4 + $0xe0] sm:$0xff]
  %v185 = vld [vmem:[%s4 + $0xe8] sm:$0xff]
  %v186 = vld [vmem:[%s4 + $0xf0] sm:$0xff]
  %v187 = vld [vmem:[%s4 + $0xf8] sm:$0xff]
  %v188 = vld [vmem:[%s4 + $0x100] sm:$0xff]
  %v189 = vld [vmem:[%s4 + $0x108] sm:$0xff]
  %v190 = vld [vmem:[%s4 + $0x110] sm:$0xff]
  %v191 = vld [vmem:[%s4 + $0x118] sm:$0xff]
  %v192 = vld [vmem:[%s4 + $0x120] sm:$0xff]
  %v193 = vld [vmem:[%s4 + $0x128] sm:$0xff]
  %v194 = vld [vmem:[%s4 + $0x130] sm:$0xff]
  %v195 = vld [vmem:[%s4 + $0x138] sm:$0xff]
  %v196 = vld [vmem:[%s4 + $0x140] sm:$0xff]
  %v197 = vld [vmem:[%s4 + $0x148] sm:$0xff]
  %v198 = vld [vmem:[%s4 + $0x150] sm:$0xff]
  %v199 = vld [vmem:[%s4 + $0x158] sm:$0xff]
  %v200 = vld [vmem:[%s4 + $0x160] sm:$0xff]
  %v201 = vld [vmem:[%s4 + $0x168] sm:$0xff]
  %v202 = vld [vmem:[%s4 + $0x170] sm:$0xff]
  %v203 = vld [vmem:[%s4 + $0x178] sm:$0xff]
  %v204 = vld [vmem:[%s4 + $0x180] sm:$0xff]
  %v205 = vld [vmem:[%s4 + $0x188] sm:$0xff]
  %v206 = vld [vmem:[%s4 + $0x190] sm:$0xff]
  %v207 = vld [vmem:[%s4 + $0x198] sm:$0xff]
  %v208 = vld [vmem:[%s4 + $0x1a0] sm:$0xff]
  %v209 = vld [vmem:[%s4 + $0x1a8] sm:$0xff]
  %v210 = vld [vmem:[%s4 + $0x1b0] sm:$0xff]
  %v211 = vld [vmem:[%s4 + $0x1b8] sm:$0xff]
  %v212 = vld [vmem:[%s4 + $0x1c0] sm:$0xff]
  %v213 = vld [vmem:[%s4 + $0x1c8] sm:$0xff]
  %v214 = vld [vmem:[%s4 + $0x1d0] sm:$0xff]
  %v215 = vld [vmem:[%s4 + $0x1d8] sm:$0xff]
  %v216 = vld [vmem:[%s4 + $0x1e0] sm:$0xff]
  %v217 = vld [vmem:[%s4 + $0x1e8] sm:$0xff]
  %v218 = vld [vmem:[%s4 + $0x1f0] sm:$0xff]
  %v219 = vld [vmem:[%s4 + $0x1f8] sm:$0xff]
  %220 = vmatprep.subr.mxu0 %v157
  %221 = vmatpush1.msra.mxu0 %v156
  %222 = vmatprep.subr.mxu0 %v161
  %223 = vmatpush1.msra.mxu0 %v160
  %224 = vmatprep.subr.mxu0 %v165
  %225 = vmatpush1.msra.mxu0 %v164
  %226 = vmatprep.subr.mxu0 %v169
  %227 = vmatpush1.msra.mxu0 %v168
  %228 = vmatprep.subr.mxu0 %v173
  %229 = vmatpush1.msra.mxu0 %v172
  %230 = vmatprep.subr.mxu0 %v177
  %231 = vmatpush1.msra.mxu0 %v176
  %232 = vmatprep.subr.mxu0 %v181
  %233 = vmatpush1.msra.mxu0 %v180
  %234 = vmatprep.subr.mxu0 %v185
  %235 = vmatpush1.msra.mxu0 %v184
  %236 = vmatprep.subr.mxu0 %v189
  %237 = vmatpush1.msra.mxu0 %v188
  %238 = vmatprep.subr.mxu0 %v193
  %239 = vmatpush1.msra.mxu0 %v192
  %240 = vmatprep.subr.mxu0 %v197
  %241 = vmatpush1.msra.mxu0 %v196
  %242 = vmatprep.subr.mxu0 %v201
  %243 = vmatpush1.msra.mxu0 %v200
  %244 = vmatprep.subr.mxu0 %v205
  %245 = vmatpush1.msra.mxu0 %v204
  %246 = vmatprep.subr.mxu0 %v209
  %247 = vmatpush1.msra.mxu0 %v208
  %248 = vmatprep.subr.mxu0 %v213
  %249 = vmatpush1.msra.mxu0 %v212
  %250 = vmatprep.subr.mxu0 %v217
  %251 = vmatpush1.msra.mxu0 %v216
  %252 = vmatprep.subr.mxu0 0.0
  %253 = vmatpush1.msra.mxu0 0.0
  %254 = vmatprep.subr.mxu0 0.0
  %255 = vmatpush1.msra.mxu0 0.0
  %256 = vmatprep.subr.mxu0 0.0
  %257 = vmatpush1.msra.mxu0 0.0
  %258 = vmatprep.subr.mxu0 0.0
  %259 = vmatpush1.msra.mxu0 0.0
  %260 = vmatprep.subr.mxu0 0.0
  %261 = vmatpush1.msra.mxu0 0.0
  %262 = vmatprep.subr.mxu0 0.0
  %263 = vmatpush1.msra.mxu0 0.0
  %264 = vmatprep.subr.mxu0 0.0
  %265 = vmatpush1.msra.mxu0 0.0
  %266 = vmatprep.subr.mxu0 0.0
  %267 = vmatpush1.msra.mxu0 0.0
  %268 = vmatprep.subr.mxu0 0.0
  %269 = vmatpush1.msra.mxu0 0.0
  %270 = vmatprep.subr.mxu0 0.0
  %271 = vmatpush1.msra.mxu0 0.0
  %272 = vmatprep.subr.mxu0 0.0
  %273 = vmatpush1.msra.mxu0 0.0
  %274 = vmatprep.subr.mxu0 0.0
  %275 = vmatpush1.msra.mxu0 0.0
  %276 = vmatprep.subr.mxu0 0.0
  %277 = vmatpush1.msra.mxu0 0.0
  %278 = vmatprep.subr.mxu0 0.0
  %279 = vmatpush1.msra.mxu0 0.0
  %280 = vmatprep.subr.mxu0 0.0
  %281 = vmatpush1.msra.mxu0 0.0
  %282 = vmatprep.subr.mxu0 0.0
  %283 = vmatpush1.msra.mxu0 0.0
  %284 = vmatprep.mubr.f32.mxu0 0.0
  %285 = vmatmul.mubr.f32.gmra.mrb[0].mxu0 %v155
  %v286 = vpop.f32.mrb[0].mxu0
  %v287 = vadd.f32 0.0, %v286
  %v288 = vpop.f32.mrb[0].mxu0
  %v289 = vadd.f32 0.0, %v288
  %290 = vdwg.mxu0
  %291 = vmatprep.subr.mxu0 %v159
  %292 = vmatpush1.msra.mxu0 %v158
  %293 = vmatprep.subr.mxu0 %v163
  %294 = vmatpush1.msra.mxu0 %v162
  %295 = vmatprep.subr.mxu0 %v167
  %296 = vmatpush1.msra.mxu0 %v166
  %297 = vmatprep.subr.mxu0 %v171
  %298 = vmatpush1.msra.mxu0 %v170
  %299 = vmatprep.subr.mxu0 %v175
  %300 = vmatpush1.msra.mxu0 %v174
  %301 = vmatprep.subr.mxu0 %v179
  %302 = vmatpush1.msra.mxu0 %v178
  %303 = vmatprep.subr.mxu0 %v183
  %304 = vmatpush1.msra.mxu0 %v182
  %305 = vmatprep.subr.mxu0 %v187
  %306 = vmatpush1.msra.mxu0 %v186
  %307 = vmatprep.subr.mxu0 %v191
  %308 = vmatpush1.msra.mxu0 %v190
  %309 = vmatprep.subr.mxu0 %v195
  %310 = vmatpush1.msra.mxu0 %v194
  %311 = vmatprep.subr.mxu0 %v199
  %312 = vmatpush1.msra.mxu0 %v198
  %313 = vmatprep.subr.mxu0 %v203
  %314 = vmatpush1.msra.mxu0 %v202
  %315 = vmatprep.subr.mxu0 %v207
  %316 = vmatpush1.msra.mxu0 %v206
  %317 = vmatprep.subr.mxu0 %v211
  %318 = vmatpush1.msra.mxu0 %v210
  %319 = vmatprep.subr.mxu0 %v215
  %320 = vmatpush1.msra.mxu0 %v214
  %321 = vmatprep.subr.mxu0 %v219
  %322 = vmatpush1.msra.mxu0 %v218
  %323 = vmatprep.subr.mxu0 0.0
  %324 = vmatpush1.msra.mxu0 0.0
  %325 = vmatprep.subr.mxu0 0.0
  %326 = vmatpush1.msra.mxu0 0.0
  %327 = vmatprep.subr.mxu0 0.0
  %328 = vmatpush1.msra.mxu0 0.0
  %329 = vmatprep.subr.mxu0 0.0
  %330 = vmatpush1.msra.mxu0 0.0
  %331 = vmatprep.subr.mxu0 0.0
  %332 = vmatpush1.msra.mxu0 0.0
  %333 = vmatprep.subr.mxu0 0.0
  %334 = vmatpush1.msra.mxu0 0.0
  %335 = vmatprep.subr.mxu0 0.0
  %336 = vmatpush1.msra.mxu0 0.0
  %337 = vmatprep.subr.mxu0 0.0
  %338 = vmatpush1.msra.mxu0 0.0
  %339 = vmatprep.subr.mxu0 0.0
  %340 = vmatpush1.msra.mxu0 0.0
  %341 = vmatprep.subr.mxu0 0.0
  %342 = vmatpush1.msra.mxu0 0.0
  %343 = vmatprep.subr.mxu0 0.0
  %344 = vmatpush1.msra.mxu0 0.0
  %345 = vmatprep.subr.mxu0 0.0
  %346 = vmatpush1.msra.mxu0 0.0
  %347 = vmatprep.subr.mxu0 0.0
  %348 = vmatpush1.msra.mxu0 0.0
  %349 = vmatprep.subr.mxu0 0.0
  %350 = vmatpush1.msra.mxu0 0.0
  %351 = vmatprep.subr.mxu0 0.0
  %352 = vmatpush1.msra.mxu0 0.0
  %353 = vmatprep.subr.mxu0 0.0
  %354 = vmatpush1.msra.mxu0 0.0
  %355 = vmatprep.mubr.f32.mxu0 0.0
  %356 = vmatmul.mubr.f32.gmra.mrb[0].mxu0 %v155
  %v357 = vpop.f32.mrb[0].mxu0
  %v358 = vadd.f32 0.0, %v357
  %v359 = vpop.f32.mrb[0].mxu0
  %v360 = vadd.f32 0.0, %v359
  %361 = vdwg.mxu0
  %v362 = vadd.f32 %v289, 1e-06
  %v363 = vrcp.pop %v362
  %v364 = vmul.f32 %v287, %v363
  %v365 = vmul.f32 %v364, 6.2831855
  %v366 = vadd.f32 %v360, 1e-06
  %v367 = vrcp.pop %v366
  %v368 = vmul.f32 %v358, %v367
  %v369 = vmul.f32 %v368, 6.2831855
  %v370 = vld [vmem:[%s5] sm:$0xff]
  %v371 = vld [vmem:[%s5 + $0x8] sm:$0xff]
  %v372 = vld [vmem:[%s6] sm:$0xff]
  %v373 = vld [vmem:[%s6 + $0x8] sm:$0xff]
  %v374 = vlaneseq
  %v375 = vshrl.u32 %v374, 7
  %v376 = vsub.s32 0, %v375
  %v377 = vrot.slane %v365, %v376
  %379 = vset.pattern.permute.xlu0 0
  %380 = vperm.xlu0 %379, %v370
  %v381 = vpop.permute.xlu0 %380
  %384 = vset.pattern.permute.xlu0 0
  %385 = vperm.xlu0 %384, %v371
  %v386 = vpop.permute.xlu0 %385
  %v388 = vmul.f32 %v377, %v381
  %v389 = vmul.f32 %v377, %v386
  %391 = vset.pattern.permute.xlu0 0
  %392 = vperm.xlu0 %391, %v372
  %v393 = vpop.permute.xlu0 %392
  %396 = vset.pattern.permute.xlu0 0
  %397 = vperm.xlu0 %396, %v373
  %v398 = vpop.permute.xlu0 %397
  %v400 = vadd.f32 %v388, %v393
  %v401 = vadd.f32 %v389, %v398
  %v402 = vand.u32 2147483647, %v400
  %vm403 = vcmp.le.f32.partialorder %v402, 0.7853982
  %vm404 = vcmp.lt.s32.totalorder %v400, 0
  %v405 = vand.u32 %v400, 2139095040
  %v406 = vshrl.u32 %v405, 23
  %v407 = vsub.s32 %v406, 127
  %v408 = vand.u32 2147483647, %v400
  %v409 = vand.u32 %v408, 8388607
  %v410 = vor.u32 %v409, 8388608
  %v411 = vsub.s32 0, %v410
  %v412 = vadd.s32 %v407, 1
  %vm413 = vcmp.gt.s32.totalorder %v412, 0
  %v414 = vsel %vm413, %v412, 0
  %v415 = vshrl.u32 %v414, 5
  %v416 = vand.u32 %v414, 31
  %v417 = vsub.s32 32, %v416
  %v418 = vshrl.u32 683565275, %v417
  %v419 = vshll.u32 683565275, %v416
  %v420 = vshrl.u32 2475754826, %v417
  %v421 = vor.u32 %v419, %v420
  %v422 = vshll.u32 2475754826, %v416
  %v423 = vshrl.u32 2131351028, %v417
  %v424 = vor.u32 %v422, %v423
  %v425 = vshll.u32 2131351028, %v416
  %v426 = vshrl.u32 2102212464, %v417
  %v427 = vor.u32 %v425, %v426
  %v428 = vshll.u32 2102212464, %v416
  %v429 = vshrl.u32 920167782, %v417
  %v430 = vor.u32 %v428, %v429
  %v431 = vshll.u32 920167782, %v416
  %v432 = vshrl.u32 1326507024, %v417
  %v433 = vor.u32 %v431, %v432
  %vm434 = vcmp.lt.s32.totalorder %v415, 1
  %vm435 = vcmp.lt.s32.totalorder %v415, 2
  %vm436 = vcmp.lt.s32.totalorder %v415, 3
  %vm437 = vcmp.lt.s32.totalorder %v415, 4
  %v438 = vsel %vm434, %v418, %v421
  %v439 = vsel %vm437, %v427, 2102212464
  %v440 = vsel %vm436, %v424, %v439
  %v441 = vsel %vm435, %v438, %v440
  %v442 = vsel %vm434, %v421, %v424
  %v443 = vsel %vm437, %v430, 920167782
  %v444 = vsel %vm436, %v427, %v443
  %v445 = vsel %vm435, %v442, %v444
  %v446 = vsel %vm434, %v424, %v427
  %v447 = vsel %vm437, %v433, 1326507024
  %v448 = vsel %vm436, %v430, %v447
  %v449 = vsel %vm435, %v446, %v448
  %v450 = vshll.u32 %v410, 8
  %v451 = vmul.u32.u64.compose %v450, %v449
  %v452 = vextract.low.u32 %v451
  %v453 = vextract.high.u32 %v451
  %v454 = vmul.u32.u64.compose %v450, %v445
  %v455 = vextract.low.u32 %v454
  %v456 = vextract.high.u32 %v454
  %v457 = vmul.u32 %v450, %v441
  %v458 = vadd.s32 %v453, %v455
  %vm459 = vc.u32 %v453, %v455
  %v460 = vadd.s32 %v456, 1
  %v461 = vsel %vm459, %v460, %v456
  %v462 = vadd.s32 %v457, %v461
  %v463 = vadd.s32 %v462, 536870912
  %v464 = vshrl.u32 %v463, 30
  %v465 = vshll.u32 %v464, 30
  %v466 = vsub.s32 %v462, %v465
  %vm467 = vcmp.lt.s32.totalorder %v466, 0
  %v468 = vsub.s32 0, %v466
  %v469 = vsel %vm467, %v468, %v466
  %v470 = vclz %v469
  %v471 = vsub.s32 %v470, 2
  %vm472 = vcmp.gt.s32.totalorder 0, %v471
  %v473 = vsel %vm472, 0, %v471
  %v474 = vsub.s32 32, %v473
  %v475 = vshll.u32 %v466, %v473
  %v476 = vshrl.u32 %v458, %v474
  %v477 = vor.u32 %v475, %v476
  %v478 = vsub.s32 4294967266, %v473
  %v479 = vadd.s32 %v478, 127
  %v480 = vshll.u32 %v479, 23
  %v481 = vor.u32 4788187, %v480
  %v482 = vand.u32 2147483647, %v481
  %v484 = vcvt.s32.f32 %v477
  %v485 = vmul.f32 %v484, %v482
  %v486 = vxor.u32 %v485, 2147483648
  %v487 = vsel %vm404, %v486, %v485
  %v488 = vsub.s32 4, %v464
  %v489 = vsel %vm404, %v488, %v464
  %v490 = vsel %vm403, %v400, %v487
  %v491 = vsel %vm403, 0, %v489
  %v492 = vcosq.f32.pop %v490
  %v493 = vsinq.f32.pop %v490
  %vm494 = vweird.f32 %v400
  %v495 = vadd.s32 %v491, 3
  %v496 = vand.u32 %v495, 3
  %vm497 = vcmp.lt.s32.totalorder %v496, 2
  %vm498 = vcmp.eq.s32.totalorder %v496, 0
  %v499 = vxor.u32 %v493, 2147483648
  %v500 = vsel %vm498, %v492, %v499
  %vm501 = vcmp.eq.s32.totalorder %v496, 2
  %v502 = vxor.u32 %v492, 2147483648
  %v503 = vsel %vm501, %v502, %v493
  %v504 = vsel %vm497, %v500, %v503
  %v505 = vsel %vm494, nan, %v504
  %v506 = vand.u32 2147483647, %v401
  %vm507 = vcmp.le.f32.partialorder %v506, 0.7853982
  %vm508 = vcmp.lt.s32.totalorder %v401, 0
  %v509 = vand.u32 %v401, 2139095040
  %v510 = vshrl.u32 %v509, 23
  %v511 = vsub.s32 %v510, 127
  %v512 = vand.u32 2147483647, %v401
  %v513 = vand.u32 %v512, 8388607
  %v514 = vor.u32 %v513, 8388608
  %v515 = vsub.s32 0, %v514
  %v516 = vadd.s32 %v511, 1
  %vm517 = vcmp.gt.s32.totalorder %v516, 0
  %v518 = vsel %vm517, %v516, 0
  %v519 = vshrl.u32 %v518, 5
  %v520 = vand.u32 %v518, 31
  %v521 = vsub.s32 32, %v520
  %v522 = vshrl.u32 683565275, %v521
  %v523 = vshll.u32 683565275, %v520
  %v524 = vshrl.u32 2475754826, %v521
  %v525 = vor.u32 %v523, %v524
  %v526 = vshll.u32 2475754826, %v520
  %v527 = vshrl.u32 2131351028, %v521
  %v528 = vor.u32 %v526, %v527
  %v529 = vshll.u32 2131351028, %v520
  %v530 = vshrl.u32 2102212464, %v521
  %v531 = vor.u32 %v529, %v530
  %v532 = vshll.u32 2102212464, %v520
  %v533 = vshrl.u32 920167782, %v521
  %v534 = vor.u32 %v532, %v533
  %v535 = vshll.u32 920167782, %v520
  %v536 = vshrl.u32 1326507024, %v521
  %v537 = vor.u32 %v535, %v536
  %vm538 = vcmp.lt.s32.totalorder %v519, 1
  %vm539 = vcmp.lt.s32.totalorder %v519, 2
  %vm540 = vcmp.lt.s32.totalorder %v519, 3
  %vm541 = vcmp.lt.s32.totalorder %v519, 4
  %v542 = vsel %vm538, %v522, %v525
  %v543 = vsel %vm541, %v531, 2102212464
  %v544 = vsel %vm540, %v528, %v543
  %v545 = vsel %vm539, %v542, %v544
  %v546 = vsel %vm538, %v525, %v528
  %v547 = vsel %vm541, %v534, 920167782
  %v548 = vsel %vm540, %v531, %v547
  %v549 = vsel %vm539, %v546, %v548
  %v550 = vsel %vm538, %v528, %v531
  %v551 = vsel %vm541, %v537, 1326507024
  %v552 = vsel %vm540, %v534, %v551
  %v553 = vsel %vm539, %v550, %v552
  %v554 = vshll.u32 %v514, 8
  %v555 = vmul.u32.u64.compose %v554, %v553
  %v556 = vextract.low.u32 %v555
  %v557 = vextract.high.u32 %v555
  %v558 = vmul.u32.u64.compose %v554, %v549
  %v559 = vextract.low.u32 %v558
  %v560 = vextract.high.u32 %v558
  %v561 = vmul.u32 %v554, %v545
  %v562 = vadd.s32 %v557, %v559
  %vm563 = vc.u32 %v557, %v559
  %v564 = vadd.s32 %v560, 1
  %v565 = vsel %vm563, %v564, %v560
  %v566 = vadd.s32 %v561, %v565
  %v567 = vadd.s32 %v566, 536870912
  %v568 = vshrl.u32 %v567, 30
  %v569 = vshll.u32 %v568, 30
  %v570 = vsub.s32 %v566, %v569
  %vm571 = vcmp.lt.s32.totalorder %v570, 0
  %v572 = vsub.s32 0, %v570
  %v573 = vsel %vm571, %v572, %v570
  %v574 = vclz %v573
  %v575 = vsub.s32 %v574, 2
  %vm576 = vcmp.gt.s32.totalorder 0, %v575
  %v577 = vsel %vm576, 0, %v575
  %v578 = vsub.s32 32, %v577
  %v579 = vshll.u32 %v570, %v577
  %v580 = vshrl.u32 %v562, %v578
  %v581 = vor.u32 %v579, %v580
  %v582 = vsub.s32 4294967266, %v577
  %v583 = vadd.s32 %v582, 127
  %v584 = vshll.u32 %v583, 23
  %v585 = vor.u32 4788187, %v584
  %v586 = vand.u32 2147483647, %v585
  %v588 = vcvt.s32.f32 %v581
  %v589 = vmul.f32 %v588, %v586
  %v590 = vxor.u32 %v589, 2147483648
  %v591 = vsel %vm508, %v590, %v589
  %v592 = vsub.s32 4, %v568
  %v593 = vsel %vm508, %v592, %v568
  %v594 = vsel %vm507, %v401, %v591
  %v595 = vsel %vm507, 0, %v593
  %v596 = vcosq.f32.pop %v594
  %v597 = vsinq.f32.pop %v594
  %vm598 = vweird.f32 %v401
  %v599 = vadd.s32 %v595, 3
  %v600 = vand.u32 %v599, 3
  %vm601 = vcmp.lt.s32.totalorder %v600, 2
  %vm602 = vcmp.eq.s32.totalorder %v600, 0
  %v603 = vxor.u32 %v597, 2147483648
  %v604 = vsel %vm602, %v596, %v603
  %vm605 = vcmp.eq.s32.totalorder %v600, 2
  %v606 = vxor.u32 %v596, 2147483648
  %v607 = vsel %vm605, %v606, %v597
  %v608 = vsel %vm601, %v604, %v607
  %v609 = vsel %vm598, nan, %v608
  %610 = vst [vmem:[%s8] sm:$0xff] %v505
  %611 = vst [vmem:[%s8 + $0x8] sm:$0xff] %v609
  %v612 = vlaneseq
  %v613 = vshrl.u32 %v612, 7
  %v614 = vsub.s32 0, %v613
  %v615 = vrot.slane %v369, %v614
  %v616 = vmul.f32 %v615, %v381
  %v617 = vmul.f32 %v615, %v386
  %v618 = vadd.f32 %v616, %v393
  %v619 = vadd.f32 %v617, %v398
  %v620 = vand.u32 2147483647, %v618
  %vm621 = vcmp.le.f32.partialorder %v620, 0.7853982
  %vm622 = vcmp.lt.s32.totalorder %v618, 0
  %v623 = vand.u32 %v618, 2139095040
  %v624 = vshrl.u32 %v623, 23
  %v625 = vsub.s32 %v624, 127
  %v626 = vand.u32 2147483647, %v618
  %v627 = vand.u32 %v626, 8388607
  %v628 = vor.u32 %v627, 8388608
  %v629 = vsub.s32 0, %v628
  %v630 = vadd.s32 %v625, 1
  %vm631 = vcmp.gt.s32.totalorder %v630, 0
  %v632 = vsel %vm631, %v630, 0
  %v633 = vshrl.u32 %v632, 5
  %v634 = vand.u32 %v632, 31
  %v635 = vsub.s32 32, %v634
  %v636 = vshrl.u32 683565275, %v635
  %v637 = vshll.u32 683565275, %v634
  %v638 = vshrl.u32 2475754826, %v635
  %v639 = vor.u32 %v637, %v638
  %v640 = vshll.u32 2475754826, %v634
  %v641 = vshrl.u32 2131351028, %v635
  %v642 = vor.u32 %v640, %v641
  %v643 = vshll.u32 2131351028, %v634
  %v644 = vshrl.u32 2102212464, %v635
  %v645 = vor.u32 %v643, %v644
  %v646 = vshll.u32 2102212464, %v634
  %v647 = vshrl.u32 920167782, %v635
  %v648 = vor.u32 %v646, %v647
  %v649 = vshll.u32 920167782, %v634
  %v650 = vshrl.u32 1326507024, %v635
  %v651 = vor.u32 %v649, %v650
  %vm652 = vcmp.lt.s32.totalorder %v633, 1
  %vm653 = vcmp.lt.s32.totalorder %v633, 2
  %vm654 = vcmp.lt.s32.totalorder %v633, 3
  %vm655 = vcmp.lt.s32.totalorder %v633, 4
  %v656 = vsel %vm652, %v636, %v639
  %v657 = vsel %vm655, %v645, 2102212464
  %v658 = vsel %vm654, %v642, %v657
  %v659 = vsel %vm653, %v656, %v658
  %v660 = vsel %vm652, %v639, %v642
  %v661 = vsel %vm655, %v648, 920167782
  %v662 = vsel %vm654, %v645, %v661
  %v663 = vsel %vm653, %v660, %v662
  %v664 = vsel %vm652, %v642, %v645
  %v665 = vsel %vm655, %v651, 1326507024
  %v666 = vsel %vm654, %v648, %v665
  %v667 = vsel %vm653, %v664, %v666
  %v668 = vshll.u32 %v628, 8
  %v669 = vmul.u32.u64.compose %v668, %v667
  %v670 = vextract.low.u32 %v669
  %v671 = vextract.high.u32 %v669
  %v672 = vmul.u32.u64.compose %v668, %v663
  %v673 = vextract.low.u32 %v672
  %v674 = vextract.high.u32 %v672
  %v675 = vmul.u32 %v668, %v659
  %v676 = vadd.s32 %v671, %v673
  %vm677 = vc.u32 %v671, %v673
  %v678 = vadd.s32 %v674, 1
  %v679 = vsel %vm677, %v678, %v674
  %v680 = vadd.s32 %v675, %v679
  %v681 = vadd.s32 %v680, 536870912
  %v682 = vshrl.u32 %v681, 30
  %v683 = vshll.u32 %v682, 30
  %v684 = vsub.s32 %v680, %v683
  %vm685 = vcmp.lt.s32.totalorder %v684, 0
  %v686 = vsub.s32 0, %v684
  %v687 = vsel %vm685, %v686, %v684
  %v688 = vclz %v687
  %v689 = vsub.s32 %v688, 2
  %vm690 = vcmp.gt.s32.totalorder 0, %v689
  %v691 = vsel %vm690, 0, %v689
  %v692 = vsub.s32 32, %v691
  %v693 = vshll.u32 %v684, %v691
  %v694 = vshrl.u32 %v676, %v692
  %v695 = vor.u32 %v693, %v694
  %v696 = vsub.s32 4294967266, %v691
  %v697 = vadd.s32 %v696, 127
  %v698 = vshll.u32 %v697, 23
  %v699 = vor.u32 4788187, %v698
  %v700 = vand.u32 2147483647, %v699
  %v702 = vcvt.s32.f32 %v695
  %v703 = vmul.f32 %v702, %v700
  %v704 = vxor.u32 %v703, 2147483648
  %v705 = vsel %vm622, %v704, %v703
  %v706 = vsub.s32 4, %v682
  %v707 = vsel %vm622, %v706, %v682
  %v708 = vsel %vm621, %v618, %v705
  %v709 = vsel %vm621, 0, %v707
  %v710 = vcosq.f32.pop %v708
  %v711 = vsinq.f32.pop %v708
  %vm712 = vweird.f32 %v618
  %v713 = vadd.s32 %v709, 3
  %v714 = vand.u32 %v713, 3
  %vm715 = vcmp.lt.s32.totalorder %v714, 2
  %vm716 = vcmp.eq.s32.totalorder %v714, 0
  %v717 = vxor.u32 %v711, 2147483648
  %v718 = vsel %vm716, %v710, %v717
  %vm719 = vcmp.eq.s32.totalorder %v714, 2
  %v720 = vxor.u32 %v710, 2147483648
  %v721 = vsel %vm719, %v720, %v711
  %v722 = vsel %vm715, %v718, %v721
  %v723 = vsel %vm712, nan, %v722
  %v724 = vand.u32 2147483647, %v619
  %vm725 = vcmp.le.f32.partialorder %v724, 0.7853982
  %vm726 = vcmp.lt.s32.totalorder %v619, 0
  %v727 = vand.u32 %v619, 2139095040
  %v728 = vshrl.u32 %v727, 23
  %v729 = vsub.s32 %v728, 127
  %v730 = vand.u32 2147483647, %v619
  %v731 = vand.u32 %v730, 8388607
  %v732 = vor.u32 %v731, 8388608
  %v733 = vsub.s32 0, %v732
  %v734 = vadd.s32 %v729, 1
  %vm735 = vcmp.gt.s32.totalorder %v734, 0
  %v736 = vsel %vm735, %v734, 0
  %v737 = vshrl.u32 %v736, 5
  %v738 = vand.u32 %v736, 31
  %v739 = vsub.s32 32, %v738
  %v740 = vshrl.u32 683565275, %v739
  %v741 = vshll.u32 683565275, %v738
  %v742 = vshrl.u32 2475754826, %v739
  %v743 = vor.u32 %v741, %v742
  %v744 = vshll.u32 2475754826, %v738
  %v745 = vshrl.u32 2131351028, %v739
  %v746 = vor.u32 %v744, %v745
  %v747 = vshll.u32 2131351028, %v738
  %v748 = vshrl.u32 2102212464, %v739
  %v749 = vor.u32 %v747, %v748
  %v750 = vshll.u32 2102212464, %v738
  %v751 = vshrl.u32 920167782, %v739
  %v752 = vor.u32 %v750, %v751
  %v753 = vshll.u32 920167782, %v738
  %v754 = vshrl.u32 1326507024, %v739
  %v755 = vor.u32 %v753, %v754
  %vm756 = vcmp.lt.s32.totalorder %v737, 1
  %vm757 = vcmp.lt.s32.totalorder %v737, 2
  %vm758 = vcmp.lt.s32.totalorder %v737, 3
  %vm759 = vcmp.lt.s32.totalorder %v737, 4
  %v760 = vsel %vm756, %v740, %v743
  %v761 = vsel %vm759, %v749, 2102212464
  %v762 = vsel %vm758, %v746, %v761
  %v763 = vsel %vm757, %v760, %v762
  %v764 = vsel %vm756, %v743, %v746
  %v765 = vsel %vm759, %v752, 920167782
  %v766 = vsel %vm758, %v749, %v765
  %v767 = vsel %vm757, %v764, %v766
  %v768 = vsel %vm756, %v746, %v749
  %v769 = vsel %vm759, %v755, 1326507024
  %v770 = vsel %vm758, %v752, %v769
  %v771 = vsel %vm757, %v768, %v770
  %v772 = vshll.u32 %v732, 8
  %v773 = vmul.u32.u64.compose %v772, %v771
  %v774 = vextract.low.u32 %v773
  %v775 = vextract.high.u32 %v773
  %v776 = vmul.u32.u64.compose %v772, %v767
  %v777 = vextract.low.u32 %v776
  %v778 = vextract.high.u32 %v776
  %v779 = vmul.u32 %v772, %v763
  %v780 = vadd.s32 %v775, %v777
  %vm781 = vc.u32 %v775, %v777
  %v782 = vadd.s32 %v778, 1
  %v783 = vsel %vm781, %v782, %v778
  %v784 = vadd.s32 %v779, %v783
  %v785 = vadd.s32 %v784, 536870912
  %v786 = vshrl.u32 %v785, 30
  %v787 = vshll.u32 %v786, 30
  %v788 = vsub.s32 %v784, %v787
  %vm789 = vcmp.lt.s32.totalorder %v788, 0
  %v790 = vsub.s32 0, %v788
  %v791 = vsel %vm789, %v790, %v788
  %v792 = vclz %v791
  %v793 = vsub.s32 %v792, 2
  %vm794 = vcmp.gt.s32.totalorder 0, %v793
  %v795 = vsel %vm794, 0, %v793
  %v796 = vsub.s32 32, %v795
  %v797 = vshll.u32 %v788, %v795
  %v798 = vshrl.u32 %v780, %v796
  %v799 = vor.u32 %v797, %v798
  %v800 = vsub.s32 4294967266, %v795
  %v801 = vadd.s32 %v800, 127
  %v802 = vshll.u32 %v801, 23
  %v803 = vor.u32 4788187, %v802
  %v804 = vand.u32 2147483647, %v803
  %v806 = vcvt.s32.f32 %v799
  %v807 = vmul.f32 %v806, %v804
  %v808 = vxor.u32 %v807, 2147483648
  %v809 = vsel %vm726, %v808, %v807
  %v810 = vsub.s32 4, %v786
  %v811 = vsel %vm726, %v810, %v786
  %v812 = vsel %vm725, %v619, %v809
  %v813 = vsel %vm725, 0, %v811
  %v814 = vcosq.f32.pop %v812
  %v815 = vsinq.f32.pop %v812
  %vm816 = vweird.f32 %v619
  %v817 = vadd.s32 %v813, 3
  %v818 = vand.u32 %v817, 3
  %vm819 = vcmp.lt.s32.totalorder %v818, 2
  %vm820 = vcmp.eq.s32.totalorder %v818, 0
  %v821 = vxor.u32 %v815, 2147483648
  %v822 = vsel %vm820, %v814, %v821
  %vm823 = vcmp.eq.s32.totalorder %v818, 2
  %v824 = vxor.u32 %v814, 2147483648
  %v825 = vsel %vm823, %v824, %v815
  %v826 = vsel %vm819, %v822, %v825
  %v827 = vsel %vm816, nan, %v826
  %828 = vst [vmem:[%s8 + $0x10] sm:$0xff] %v723
  %829 = vst [vmem:[%s8 + $0x18] sm:$0xff] %v827
  // Predicated region
  $region30: #{joiner_forward.1} parent=0 // pred_check
    _
  $region31: #{joiner_forward.1} parent=0 // pred_check_branch
    %831 = sbr.rel (0) target = $region33
  $region32: #{joiner_forward.1} parent=0 // pred_region
    _
  $region33: #{joiner_forward.1} parent=0 // pred_fallthru
    _
  // Predicated region
  $region34: #{joiner_forward.1} parent=0 // pred_check
    _
  $region35: #{joiner_forward.1} parent=0 // pred_check_branch
    %833 = sbr.rel (0) target = $region37
  $region36: #{joiner_forward.1} parent=0 // pred_region
    _
  $region37: #{joiner_forward.1} parent=0 // pred_fallthru
    _
  // Predicated region
  $region38: #{joiner_forward.1} parent=0 // pred_check
    _
  $region39: #{joiner_forward.1} parent=0 // pred_check_branch
    %835 = sbr.rel (0) target = $region41
  $region40: #{joiner_forward.1} parent=0 // pred_region
    _
  $region41: #{joiner_forward.1} parent=0 // pred_fallthru
    _
  // Predicated region
  $region42: #{joiner_forward.1} parent=0 // pred_check
    _
  $region43: #{joiner_forward.1} parent=0 // pred_check_branch
    %837 = sbr.rel (0) target = $region45
  $region44: #{joiner_forward.1} parent=0 // pred_region
    _
  $region45: #{joiner_forward.1} parent=0 // pred_fallthru
    _

</llo_original>
